<compile_context>
chip_gen: v7x
topology: tpu7x:2x2x1
jax: 0.10.0
libtpu: 0.0.40
codegen_flags: <defaults>
</compile_context>

<pallas_src>
import functools

import jax
import jax.numpy as jnp
from jax import lax
from jax.experimental import pallas as pl
from jax.experimental.pallas import tpu as pltpu


def _rvq_kernel(x_ref, embed_ref, esq_ref, qout_ref, codes_ref, *, use_bf16_dist):
    """One grid step = (one token tile, one residual-quantizer layer)."""
    q = pl.program_id(1)

    @pl.when(q == 0)
    def _():
        qout_ref[...] = jnp.zeros_like(qout_ref)

    # residual is identically x - (sum of quantized for layers < q)
    r = x_ref[...] - qout_ref[...]          # (D, tt)
    embed = embed_ref[0]                    # (K, D)  this layer's codebook
    e_sq = esq_ref[0]                       # (K, 1)  per-code squared norms

    # dist(k, t) = 2 <e_k, r_t> - ||e_k||^2 ; per-token ||r_t||^2 is constant over k
    # and cannot change the argmax, so it is dropped (same code selection).
    if use_bf16_dist:
        dots = lax.dot_general(embed.astype(jnp.bfloat16), r.astype(jnp.bfloat16),
                               (((1,), (0,)), ((), ())),
                               preferred_element_type=jnp.float32)        # (K, tt)
    else:
        dots = lax.dot_general(embed, r, (((1,), (0,)), ((), ())),
                               preferred_element_type=jnp.float32)        # (K, tt)
    dist = 2.0 * dots - e_sq                                              # (K, tt)

    # argmax over codes (sublane axis); first occurrence on ties (== jnp.argmax)
    m = jnp.max(dist, axis=0, keepdims=True)                              # (1, tt)
    iota_k = lax.broadcasted_iota(jnp.int32, dist.shape, 0)               # (K, tt)
    k_codes = dist.shape[0]
    cand = jnp.where(dist == m, iota_k, k_codes)
    ind = jnp.min(cand, axis=0, keepdims=True)                            # (1, tt)

    # dequantize via one-hot matmul (exact row gather on the MXU, kept in f32)
    onehot = (iota_k == ind).astype(jnp.float32)                          # (K, tt)
    quantized = lax.dot_general(embed, onehot, (((0,), (0,)), ((), ())),
                                preferred_element_type=jnp.float32)       # (D, tt)

    qout_ref[...] = qout_ref[...] + quantized
    codes_ref[...] = ind[None]                                            # (1,1,tt)


def _round_up(a, b):
    return ((a + b - 1) // b) * b


def rvq_forward(x, codebooks, *, block_tokens=512, use_bf16_dist=False):
    """Forward pass of ResidualVectorQuantizer (eval mode).

    Args:
      x:         (B, D, N) float32  -- PyTorch NCL layout.
      codebooks: (n_q, K, D) float32.
      block_tokens: token-tile size (lane axis); tune per TPU generation.
      use_bf16_dist: run the distance matmul in bf16 (faster on v6e/v7x, but may
        flip codes on near-ties vs the f32 reference).

    Returns:
      quantized (B, D, N), codes (n_q, B, N) int32,
      commit_loss scalar (0.0 in eval), quantized_list (empty; layers=None).
    """
    B, D, N = x.shape
    n_q, K, Dc = codebooks.shape
    assert Dc == D
    T = B * N

    # native (D, T) layout: tokens on the lane axis; only a major-axis permute.
    x_dt = jnp.transpose(x, (1, 0, 2)).reshape(D, T).astype(jnp.float32)

    tt = min(block_tokens, _round_up(T, 128))
    T_pad = _round_up(T, tt)
    if T_pad != T:
        x_dt = jnp.pad(x_dt, ((0, 0), (0, T_pad - T)))

    cb = codebooks.astype(jnp.float32)
    e_sq = jnp.sum(cb * cb, axis=-1, keepdims=True)       # (n_q, K, 1)

    n_tiles = T_pad // tt
    kernel = functools.partial(_rvq_kernel, use_bf16_dist=use_bf16_dist)

    qout, codes = pl.pallas_call(
        kernel,
        out_shape=(
            jax.ShapeDtypeStruct((D, T_pad), jnp.float32),
            jax.ShapeDtypeStruct((n_q, 1, T_pad), jnp.int32),
        ),
        grid=(n_tiles, n_q),
        in_specs=[
            pl.BlockSpec((D, tt), lambda t, q: (0, t)),
            pl.BlockSpec((1, K, D), lambda t, q: (q, 0, 0)),
            pl.BlockSpec((1, K, 1), lambda t, q: (q, 0, 0)),
        ],
        out_specs=(
            pl.BlockSpec((D, tt), lambda t, q: (0, t)),        # resident across q
            pl.BlockSpec((1, 1, tt), lambda t, q: (q, 0, t)),  # lane-dense codes
        ),
        compiler_params=pltpu.CompilerParams(
            dimension_semantics=("parallel", "arbitrary"),
            vmem_limit_bytes=48 * 1024 * 1024),
    )(x_dt, cb, e_sq)

    # drop token padding, convert back to PyTorch conventions
    quantized = jnp.transpose(qout[:, :T].reshape(D, B, N), (1, 0, 2))   # (B, D, N)
    codes_out = codes[:, 0, :T].reshape(n_q, B, N)
    commit_loss = jnp.float32(0.0)   # eval: per-layer losses are 0, mean == 0
    quantized_list = []              # layers=None -> nothing collected
    return quantized, codes_out, commit_loss, quantized_list


def rvq_forward_ref(x, codebooks):
    """Plain-JAX reference matching EuclideanCodebook / RVQ forward (eval)."""
    B, D, N = x.shape
    n_q, K, _ = codebooks.shape
    resid = jnp.transpose(x, (0, 2, 1)).reshape(-1, D)
    qout = jnp.zeros_like(resid)
    codes = []
    for i in range(n_q):
        e = codebooks[i]
        dist = -(jnp.sum(resid ** 2, -1, keepdims=True)
                 - 2.0 * resid @ e.T
                 + jnp.sum(e ** 2, -1)[None, :])
        ind = jnp.argmax(dist, axis=-1)
        qz = e[ind]
        resid = resid - qz
        qout = qout + qz
        codes.append(ind)
    quantized = jnp.transpose(qout.reshape(B, N, D), (0, 2, 1))
    return quantized, jnp.stack(codes).reshape(n_q, B, N)


def make_codebooks(key, n_q, bins, dim):
    # Deterministic stand-in for uniform_init / kmeans-learned codebooks.
    bound = (6.0 / dim) ** 0.5
    return jax.random.uniform(key, (n_q, bins, dim), jnp.float32, -bound, bound)


if __name__ == "__main__":
    key = jax.random.PRNGKey(0)
    k_x, k_cb = jax.random.split(key)

    B, D, N = 2, 32, 8          # batch, dimension, frames
    n_q, bins = 4, 128          # residual quantizers, codebook size

    x = jax.random.normal(k_x, (B, D, N), jnp.float32)
    codebooks = make_codebooks(k_cb, n_q, bins, D)

    quantized, codes, loss, q_list = jax.jit(rvq_forward)(x, codebooks)
    jax.block_until_ready((quantized, codes, loss))

    # correctness check against plain-JAX reference
    q_ref, c_ref = rvq_forward_ref(x, codebooks)
    assert quantized.shape == (B, D, N)
    assert codes.shape == (n_q, B, N)
    assert jnp.allclose(quantized, q_ref, atol=1e-5, rtol=1e-5)
    assert jnp.array_equal(codes, c_ref)
    assert float(loss) == 0.0

    print("KERNEL_OK")
</pallas_src>

<mosaic_0001>
module attributes {stable_mosaic.version = 11 : i64} {
  func.func @_rvq_kernel(%arg0: i32, %arg1: i32, %arg2: memref<32x128xf32, #tpu.memory_space<vmem>>, %arg3: memref<1x128x32xf32, #tpu.memory_space<vmem>>, %arg4: memref<1x128x1xf32, #tpu.memory_space<vmem>>, %arg5: memref<32x128xf32, #tpu.memory_space<vmem>>, %arg6: memref<1x1x128xi32, #tpu.memory_space<vmem>>) attributes {dimension_semantics = [#tpu.dimension_semantics<parallel>, #tpu.dimension_semantics<arbitrary>], iteration_bounds = array<i64: 1, 4>, scalar_prefetch = 0 : i64, scratch_operands = 0 : i64, tpu.core_type = #tpu.core_type<tc>, window_params = [{transform_indices = @transform_0, window_bounds = array<i64: 32, 128>}, {transform_indices = @transform_1, window_bounds = array<i64: 1, 128, 32>}, {transform_indices = @transform_2, window_bounds = array<i64: 1, 128, 1>}, {transform_indices = @transform_3, window_bounds = array<i64: 32, 128>}, {transform_indices = @transform_4, window_bounds = array<i64: 1, 1, 128>}]} {
    %c0_i32 = arith.constant 0 : i32
    %0 = arith.cmpi eq, %arg1, %c0_i32 : i32
    %1 = arith.extui %0 : i1 to i32
    %c0_i32_0 = arith.constant 0 : i32
    %2 = arith.cmpi ne, %1, %c0_i32_0 : i32
    scf.if %2 {
      %cst_21 = arith.constant 0.000000e+00 : f32
      %34 = vector.broadcast %cst_21 : f32 to vector<32x128xf32>
      %c0_22 = arith.constant 0 : index
      %c0_23 = arith.constant 0 : index
      %35 = vector.load %arg5[%c0_22, %c0_23] : memref<32x128xf32, #tpu.memory_space<vmem>>, vector<32x128xf32>
      tpu.vector_store %arg5[%c0_22, %c0_23], %34 {strides = array<i32>} : memref<32x128xf32, #tpu.memory_space<vmem>>, vector<32x128xf32>,
    } else {
    }
    %c0 = arith.constant 0 : index
    %c0_1 = arith.constant 0 : index
    %3 = vector.load %arg2[%c0, %c0_1] : memref<32x128xf32, #tpu.memory_space<vmem>>, vector<32x128xf32>
    %c0_2 = arith.constant 0 : index
    %c0_3 = arith.constant 0 : index
    %4 = vector.load %arg5[%c0_2, %c0_3] : memref<32x128xf32, #tpu.memory_space<vmem>>, vector<32x128xf32>
    %5 = arith.subf %3, %4 : vector<32x128xf32>
    %c0_4 = arith.constant 0 : index
    %c0_5 = arith.constant 0 : index
    %c0_6 = arith.constant 0 : index
    %6 = vector.load %arg3[%c0_4, %c0_5, %c0_6] : memref<1x128x32xf32, #tpu.memory_space<vmem>>, vector<1x128x32xf32>
    %7 = vector.shape_cast %6 : vector<1x128x32xf32> to vector<128x32xf32>
    %c0_7 = arith.constant 0 : index
    %c0_8 = arith.constant 0 : index
    %c0_9 = arith.constant 0 : index
    %8 = vector.load %arg4[%c0_7, %c0_8, %c0_9] : memref<1x128x1xf32, #tpu.memory_space<vmem>>, vector<1x128x1xf32>
    %9 = vector.shape_cast %8 : vector<1x128x1xf32> to vector<128x1xf32>
    %cst = arith.constant dense<0.000000e+00> : vector<128x128xf32>
    %10 = tpu.matmul %7, %5, %cst {dimension_numbers = #tpu.dot_dimension_numbers<[1], [0], [0], [1], [0, 0, 1, 1], [], []>} : vector<128x32xf32>, vector<32x128xf32>, vector<128x128xf32> -> vector<128x128xf32>
    %cst_10 = arith.constant 2.000000e+00 : f32
    %11 = vector.broadcast %cst_10 : f32 to vector<128x128xf32>
    %12 = arith.mulf %11, %10 : vector<128x128xf32>
    %13 = vector.broadcast %9 : vector<128x1xf32> to vector<128x128xf32>
    %14 = arith.subf %12, %13 : vector<128x128xf32>
    %cst_11 = arith.constant dense<0xFF800000> : vector<128xf32>
    %15 = vector.multi_reduction <maximumf>, %14, %cst_11 [0] : vector<128x128xf32> to vector<128xf32>
    %16 = vector.shape_cast %15 : vector<128xf32> to vector<1x128xf32>
    %17 = tpu.iota {dimensions = array<i32: 0>} : vector<128x128xi32>
    %18 = vector.broadcast %16 : vector<1x128xf32> to vector<128x128xf32>
    %19 = arith.cmpf oeq, %14, %18 : vector<128x128xf32>
    %c128_i32 = arith.constant 128 : i32
    %20 = vector.broadcast %c128_i32 : i32 to vector<128x128xi32>
    %21 = arith.select %19, %17, %20 : vector<128x128xi1>, vector<128x128xi32>
    %cst_12 = arith.constant dense<2147483647> : vector<128xi32>
    %22 = vector.multi_reduction <minsi>, %21, %cst_12 [0] : vector<128x128xi32> to vector<128xi32>
    %23 = vector.shape_cast %22 : vector<128xi32> to vector<1x128xi32>
    %24 = vector.broadcast %23 : vector<1x128xi32> to vector<128x128xi32>
    %25 = arith.cmpi eq, %17, %24 : vector<128x128xi32>
    %26 = arith.extui %25 : vector<128x128xi1> to vector<128x128xi32>
    %27 = arith.sitofp %26 : vector<128x128xi32> to vector<128x128xf32>
    %cst_13 = arith.constant dense<0.000000e+00> : vector<32x128xf32>
    %28 = tpu.matmul %7, %27, %cst_13 {dimension_numbers = #tpu.dot_dimension_numbers<[0], [0], [1], [1], [0, 1, 1, 1], [], []>} : vector<128x32xf32>, vector<128x128xf32>, vector<32x128xf32> -> vector<32x128xf32>
    %c0_14 = arith.constant 0 : index
    %c0_15 = arith.constant 0 : index
    %29 = vector.load %arg5[%c0_14, %c0_15] : memref<32x128xf32, #tpu.memory_space<vmem>>, vector<32x128xf32>
    %30 = arith.addf %29, %28 : vector<32x128xf32>
    %c0_16 = arith.constant 0 : index
    %c0_17 = arith.constant 0 : index
    %31 = vector.load %arg5[%c0_16, %c0_17] : memref<32x128xf32, #tpu.memory_space<vmem>>, vector<32x128xf32>
    tpu.vector_store %arg5[%c0_16, %c0_17], %30 {strides = array<i32>} : memref<32x128xf32, #tpu.memory_space<vmem>>, vector<32x128xf32>,
    %32 = vector.shape_cast %23 : vector<1x128xi32> to vector<1x1x128xi32>
    %c0_18 = arith.constant 0 : index
    %c0_19 = arith.constant 0 : index
    %c0_20 = arith.constant 0 : index
    %33 = vector.load %arg6[%c0_18, %c0_19, %c0_20] : memref<1x1x128xi32, #tpu.memory_space<vmem>>, vector<1x1x128xi32>
    tpu.vector_store %arg6[%c0_18, %c0_19, %c0_20], %32 {strides = array<i32>} : memref<1x1x128xi32, #tpu.memory_space<vmem>>, vector<1x1x128xi32>,
    return
  }
  func.func @transform_0(%arg0: i32, %arg1: i32) -> (i32, i32) {
    %c0_i32 = arith.constant 0 : i32
    %c0_i32_0 = arith.constant 0 : i32
    return %c0_i32, %arg0 : i32, i32
  }
  func.func @transform_1(%arg0: i32, %arg1: i32) -> (i32, i32, i32) {
    %c0_i32 = arith.constant 0 : i32
    %c0_i32_0 = arith.constant 0 : i32
    %c0_i32_1 = arith.constant 0 : i32
    return %arg1, %c0_i32, %c0_i32_0 : i32, i32, i32
  }
  func.func @transform_2(%arg0: i32, %arg1: i32) -> (i32, i32, i32) {
    %c0_i32 = arith.constant 0 : i32
    %c0_i32_0 = arith.constant 0 : i32
    %c0_i32_1 = arith.constant 0 : i32
    return %arg1, %c0_i32, %c0_i32_0 : i32, i32, i32
  }
  func.func @transform_3(%arg0: i32, %arg1: i32) -> (i32, i32) {
    %c0_i32 = arith.constant 0 : i32
    %c0_i32_0 = arith.constant 0 : i32
    return %c0_i32, %arg0 : i32, i32
  }
  func.func @transform_4(%arg0: i32, %arg1: i32) -> (i32, i32, i32) {
    %c0_i32 = arith.constant 0 : i32
    %c0_i32_0 = arith.constant 0 : i32
    return %arg1, %c0_i32, %arg0 : i32, i32, i32
  }
}

</mosaic_0001>

<llo_original>
// kernel: squeeze.1
$region0: #{squeeze.1}
  %s0 = inlined_call_operand.vmem [shape: s32[4,16], index: 0, kind: input, shape index: {}]
  %s1 = inlined_call_operand.hbm [shape: s32[4,2,8], index: 1, kind: output, shape index: {}]
  $region1: #{squeeze.1} parent=0
    #allocation0 [shape = 'u8[4096]{0}', space=vmem, size = 0x1000, scoped, tag = 'operand span for operand 1']
    #allocation1 [shape = 's32[1]{0}', space=sflag, size = 0x4, scoped, tag = 'scoped memory for squeeze.1']
    #allocation2 [shape = 'u8[16384]{0}', space=vmem, size = 0x4000, scoped, tag = 'scoped mem for output reshape']
    #allocation3 [shape = 'u8[4096]{0}', space=vmem, size = 0x1000, scoped, tag = 'scoped mem for input reshape']
    %2 = vsyncpa [#allocation1], 0
    %s4 = sshllo.u32 0, 4
    %v5 = vld [vmem:[%s0] sm:%s4]
    %6 = vst [vmem:[#allocation3] sm:%s4] %v5
    %v7 = vld [vmem:[#allocation3] sm:$0xf]
    %vm8 = vcmask 64512
    %9 = vst.msk [vmem:[#allocation2] ss:$8 sm:$0xf] %vm8, %v7
    %v10 = vld [vmem:[#allocation3] sm:$0xf]
    %11 = vrot.lane.b32.xlu0 %v10, 120
    %v12 = vpop.permute.xlu0 %11
    %vm13 = vcmask 64512
    %s14 = scalar_lea.vmem [#allocation2], 1
    %15 = vst.msk [vmem:[%s14] ss:$8 sm:$0xf] %vm13, %v12
    %s17 = sshllo.u32 0, 2
    %v19 = vld [vmem:[#allocation2] sm:%s17]
    %s20 = sshllo.u32 0, 2
    %21 = vst [vmem:[#allocation0] sm:%s20] %v19
    %s22 = scalar_lea.vmem [#allocation2], 8
    %v23 = vld [vmem:[%s22] sm:%s17]
    %s24 = sshllo.u32 0, 2
    %s25 = scalar_lea.vmem [#allocation0], 2
    %26 = vst [vmem:[%s25] sm:%s24] %v23
    %s27 = scalar_lea.vmem [#allocation2], 16
    %v28 = vld [vmem:[%s27] sm:%s17]
    %s29 = sshllo.u32 0, 2
    %s30 = smul.addr 2, 2
    %s31 = scalar_lea.vmem [#allocation0], %s30
    %32 = vst [vmem:[%s31] sm:%s29] %v28
    %s33 = scalar_lea.vmem [#allocation2], 24
    %v34 = vld [vmem:[%s33] sm:%s17]
    %s35 = sshllo.u32 0, 2
    %s36 = smul.addr 2, 3
    %s37 = scalar_lea.vmem [#allocation0], %s36
    %38 = vst [vmem:[%s37] sm:%s35] %v34
    %s40 = ssub.s32 128, 128
    %41 = vsyncadd [#allocation1], %s40
    %s43 = sshll.u32 [#allocation0], 4
    %s44 = int_to_ptr.vmem [resolvable:$true] %s43
    %46 = dma.vmem_to_hbm [thread:$0]  %s44, 128, %s1, [#allocation1]
    %47 = dma.done [#allocation1], 128
    %48 = vsyncpa [#allocation1], 1

// kernel: rvq_forward.1
$region0: #{rvq_forward.1}
  #allocation0 [shape = 'u32[]', space=smem, size = 0x4, offset = 0x4, fixed_abs, tag = 'smem constant byte address 0x4 - core index']
  #allocation1 [shape = 'u32[144,128]{1,0:T(1,128)}', space=vmem, size = 0x12000, scoped, tag = 'internal scratch']
  %s0 = inlined_call_operand.vmem [shape: f32[32,128], index: 0, kind: input, shape index: {}]
  %s1 = inlined_call_operand.vmem [shape: f32[4,128,32], index: 1, kind: input, shape index: {}]
  %s2 = inlined_call_operand.vmem [shape: f32[4,128,1], index: 2, kind: input, shape index: {}]
  %s3 = inlined_call_operand.vmem [shape: f32[32,128], index: 3, kind: output, shape index: {0}]
  %s4 = inlined_call_operand.vmem [shape: s32[4,1,128], index: 4, kind: output, shape index: {1}]
  %5 = xla_tuple %s3, %s4
  %s6 = sld [smem:[#allocation0]]
  $region57: #{rvq_forward.1} parent=0
    _
  %s8 = ssub.s32 1, %s6
  %s9 = scalar_select 0, %s8, %s6
  loop: start=0, step=1, limit=6
  $region2: #{rvq_forward.1} parent=0 // loop_pre_header
    _
  $region3: #{rvq_forward.1} parent=0 // loop_header
    %s11 = sphi 0, %s15
    %p12 = scmp.ge.s32.totalorder %s11, 6
    %s18 = sphi 0, %s30
    %s19 = sphi 0, %s26
    %s20 = sphi 0, %s18
    %s21 = sphi 0, %s19
    %s22 = sphi 0, %s20
    %s23 = sphi 0, %s21
    %s33 = sphi 0, %s35
    %s36 = sphi 0, %s33
    %s37 = sphi 0, %s36
    %s53 = sphi 0, %s37
    %s59 = sphi 0, %s61
    %s62 = sphi 0, %s59
    %s63 = sphi 0, %s62
    %s79 = sphi 0, %s63
    %s85 = sphi 0, %s87
    %s88 = sphi 0, %s85
    %s89 = sphi 0, %s88
    %s105 = sphi 0, %s89
    %s111 = sphi 0, %s113
    %s114 = sphi 0, %s111
    %s115 = sphi 0, %s114
    %s131 = sphi 0, %s115
    %s139 = sphi 0, %s141
    %s142 = sphi 0, %s139
    %s143 = sphi 0, %s142
    %s159 = sphi 0, %s143
  $region4: #{rvq_forward.1} parent=0 // loop_header_branch
    %14 = sbr.rel (%p12) target = $region8
  $region5: #{rvq_forward.1} parent=0 // loop_body
    %s16 = ssub.s32 %s11, 1
    %s17 = ssub.s32 %s11, 2
    %s24 = sadd.s32 1, %s19
    %p25 = scmp.ge.s32.totalorder %s24, 4
    %s26 = scalar_select %p25, 0, %s24
    %s27 = sadd.s32 1, %s18
    %s28 = scalar_select %p25, %s27, %s18
    %p29 = scmp.ge.s32.totalorder %s28, 1
    %s30 = scalar_select %p29, 0, %s28
    %s31 = ssub.s32 %s18, %s30
    %p32 = scmp.eq.s32.totalorder %s31, 0
    %s34 = sadd.s32 %s33, 1
    %s35 = scalar_select %p32, %s33, %s34
    %p38 = pneg %p32
    %p39 = scmp.eq.s32.totalorder %s11, 3
    %p40 = por %p38, %p39
    %p41 = scmp.ne.s32.totalorder %s33, %s36
    %p42 = scmp.eq.s32.totalorder %s11, 0
    %p43 = por %p41, %p42
    %p44 = scmp.ne.s32.totalorder %s33, %s36
    %p45 = scmp.eq.s32.totalorder %s16, 3
    %p46 = por %p44, %p45
    %p47 = scmp.ne.s32.totalorder %s36, %s37
    %p48 = scmp.eq.s32.totalorder %s16, 0
    %p49 = por %p47, %p48
    %p50 = scmp.ne.s32.totalorder %s36, %s37
    %p51 = scmp.eq.s32.totalorder %s17, 3
    %p52 = por %p50, %p51
    %p54 = scmp.ne.s32.totalorder %s37, %s53
    %p55 = scmp.eq.s32.totalorder %s17, 0
    %p56 = por %p54, %p55
    %s57 = ssub.s32 %s19, %s26
    %p58 = scmp.eq.s32.totalorder %s57, 0
    %s60 = sadd.s32 %s59, 1
    %s61 = scalar_select %p58, %s59, %s60
    %p64 = pneg %p58
    %p65 = scmp.eq.s32.totalorder %s11, 3
    %p66 = por %p64, %p65
    %p67 = scmp.ne.s32.totalorder %s59, %s62
    %p68 = scmp.eq.s32.totalorder %s11, 0
    %p69 = por %p67, %p68
    %p70 = scmp.ne.s32.totalorder %s59, %s62
    %p71 = scmp.eq.s32.totalorder %s16, 3
    %p72 = por %p70, %p71
    %p73 = scmp.ne.s32.totalorder %s62, %s63
    %p74 = scmp.eq.s32.totalorder %s16, 0
    %p75 = por %p73, %p74
    %p76 = scmp.ne.s32.totalorder %s62, %s63
    %p77 = scmp.eq.s32.totalorder %s17, 3
    %p78 = por %p76, %p77
    %p80 = scmp.ne.s32.totalorder %s63, %s79
    %p81 = scmp.eq.s32.totalorder %s17, 0
    %p82 = por %p80, %p81
    %s83 = ssub.s32 %s19, %s26
    %p84 = scmp.eq.s32.totalorder %s83, 0
    %s86 = sadd.s32 %s85, 1
    %s87 = scalar_select %p84, %s85, %s86
    %p90 = pneg %p84
    %p91 = scmp.eq.s32.totalorder %s11, 3
    %p92 = por %p90, %p91
    %p93 = scmp.ne.s32.totalorder %s85, %s88
    %p94 = scmp.eq.s32.totalorder %s11, 0
    %p95 = por %p93, %p94
    %p96 = scmp.ne.s32.totalorder %s85, %s88
    %p97 = scmp.eq.s32.totalorder %s16, 3
    %p98 = por %p96, %p97
    %p99 = scmp.ne.s32.totalorder %s88, %s89
    %p100 = scmp.eq.s32.totalorder %s16, 0
    %p101 = por %p99, %p100
    %p102 = scmp.ne.s32.totalorder %s88, %s89
    %p103 = scmp.eq.s32.totalorder %s17, 3
    %p104 = por %p102, %p103
    %p106 = scmp.ne.s32.totalorder %s89, %s105
    %p107 = scmp.eq.s32.totalorder %s17, 0
    %p108 = por %p106, %p107
    %s109 = ssub.s32 %s18, %s30
    %p110 = scmp.eq.s32.totalorder %s109, 0
    %s112 = sadd.s32 %s111, 1
    %s113 = scalar_select %p110, %s111, %s112
    %p116 = pneg %p110
    %p117 = scmp.eq.s32.totalorder %s11, 3
    %p118 = por %p116, %p117
    %p119 = scmp.ne.s32.totalorder %s111, %s114
    %p120 = scmp.eq.s32.totalorder %s11, 0
    %p121 = por %p119, %p120
    %p122 = scmp.ne.s32.totalorder %s111, %s114
    %p123 = scmp.eq.s32.totalorder %s16, 3
    %p124 = por %p122, %p123
    %p125 = scmp.ne.s32.totalorder %s114, %s115
    %p126 = scmp.eq.s32.totalorder %s16, 0
    %p127 = por %p125, %p126
    %p128 = scmp.ne.s32.totalorder %s114, %s115
    %p129 = scmp.eq.s32.totalorder %s17, 3
    %p130 = por %p128, %p129
    %p132 = scmp.ne.s32.totalorder %s115, %s131
    %p133 = scmp.eq.s32.totalorder %s17, 0
    %p134 = por %p132, %p133
    %s135 = ssub.s32 %s19, %s26
    %s136 = ssub.s32 %s18, %s30
    %s137 = sor.u32 %s135, %s136
    %p138 = scmp.eq.s32.totalorder %s137, 0
    %s140 = sadd.s32 %s139, 1
    %s141 = scalar_select %p138, %s139, %s140
    %p144 = pneg %p138
    %p145 = scmp.eq.s32.totalorder %s11, 3
    %p146 = por %p144, %p145
    %p147 = scmp.ne.s32.totalorder %s139, %s142
    %p148 = scmp.eq.s32.totalorder %s11, 0
    %p149 = por %p147, %p148
    %p150 = scmp.ne.s32.totalorder %s139, %s142
    %p151 = scmp.eq.s32.totalorder %s16, 3
    %p152 = por %p150, %p151
    %p153 = scmp.ne.s32.totalorder %s142, %s143
    %p154 = scmp.eq.s32.totalorder %s16, 0
    %p155 = por %p153, %p154
    %p156 = scmp.ne.s32.totalorder %s142, %s143
    %p157 = scmp.eq.s32.totalorder %s17, 3
    %p158 = por %p156, %p157
    %p160 = scmp.ne.s32.totalorder %s143, %s159
    %p161 = scmp.eq.s32.totalorder %s17, 0
    %p162 = por %p160, %p161
    %p163 = scmp.le.s32.totalorder 1, %s11
    %p164 = scmp.lt.s32.totalorder %s11, 5
    %p165 = pnand %p163, %p164
    %p166 = pneg %p165
    // Predicated region
    $region9: #{rvq_forward.1} parent=5 // pred_check
      _
    $region10: #{rvq_forward.1} parent=5 // pred_check_branch
      %168 = sbr.rel (%p165) target = $region12
    $region11: #{rvq_forward.1} parent=5 // pred_region
      %s169 = ssub.s32 %s11, 1
      // Predicated region
      $region13: #{rvq_forward.1} parent=11 // pred_check
        %p170 = pneg %p49
      $region14: #{rvq_forward.1} parent=11 // pred_check_branch
        %172 = sbr.rel (%p170) target = $region16
      $region15: #{rvq_forward.1} parent=11 // pred_region
        %p173 = scmp.lt.s32.totalorder %s20, 0
        %s174 = scalar_select %p173, %s20, 0
        %s175 = smul.addr %s174, 8
        %s176 = scalar_lea.vmem %s0, %s175
      $region16: #{rvq_forward.1} parent=11 // pred_fallthru
        _
    $region12: #{rvq_forward.1} parent=5 // pred_fallthru
      _
    %p177 = scmp.lt.s32.totalorder %s11, 4
    // Predicated region
    $region17: #{rvq_forward.1} parent=5 // pred_check
      %p178 = pneg %p177
    $region18: #{rvq_forward.1} parent=5 // pred_check_branch
      %180 = sbr.rel (%p178) target = $region20
    $region19: #{rvq_forward.1} parent=5 // pred_region
      // Predicated region
      $region21: #{rvq_forward.1} parent=19 // pred_check
        %p181 = pneg %p69
      $region22: #{rvq_forward.1} parent=19 // pred_check_branch
        %183 = sbr.rel (%p181) target = $region24
      $region23: #{rvq_forward.1} parent=19 // pred_region
        %p184 = scmp.lt.s32.totalorder %s19, 3
        %s185 = scalar_select %p184, %s19, 3
        %s186 = smul.addr %s185, 16
        %s187 = smul.addr %s186, 8
        %s188 = scalar_lea.vmem %s1, %s187
      $region24: #{rvq_forward.1} parent=19 // pred_fallthru
        _
      // Predicated region
      $region25: #{rvq_forward.1} parent=19 // pred_check
        %p189 = pneg %p95
      $region26: #{rvq_forward.1} parent=19 // pred_check_branch
        %191 = sbr.rel (%p189) target = $region28
      $region27: #{rvq_forward.1} parent=19 // pred_region
        %p192 = scmp.lt.s32.totalorder %s19, 3
        %s193 = scalar_select %p192, %s19, 3
        %s194 = smul.addr %s193, 16
        %s195 = smul.addr %s194, 8
        %s196 = scalar_lea.vmem %s2, %s195
      $region28: #{rvq_forward.1} parent=19 // pred_fallthru
        _
    $region20: #{rvq_forward.1} parent=5 // pred_fallthru
      _
    %p197 = scmp.le.s32.totalorder 1, %s11
    %p198 = scmp.lt.s32.totalorder %s11, 5
    %p199 = pnand %p197, %p198
    %p200 = pneg %p199
    // Predicated region
    $region29: #{rvq_forward.1} parent=5 // pred_check
      _
    $region30: #{rvq_forward.1} parent=5 // pred_check_branch
      %202 = sbr.rel (%p199) target = $region32
    $region31: #{rvq_forward.1} parent=5 // pred_region
      %s203 = ssub.s32 %s11, 1
      %p204 = scmp.lt.s32.totalorder %s20, 0
      %s205 = scalar_select %p204, %s20, 0
      %s206 = smul.addr %s205, 8
      %s207 = scalar_lea.vmem %s0, %s206
      %p208 = pneg %p49
      %p209 = pneg %p46
      %p210 = scmp.lt.s32.totalorder %s21, 3
      %s211 = scalar_select %p210, %s21, 3
      %s212 = smul.addr %s211, 16
      %s213 = smul.addr %s212, 8
      %s214 = scalar_lea.vmem %s1, %s213
      %p215 = pneg %p75
      %p216 = pneg %p72
      %p217 = scmp.lt.s32.totalorder %s21, 3
      %s218 = scalar_select %p217, %s21, 3
      %s219 = smul.addr %s218, 16
      %s220 = smul.addr %s219, 8
      %s221 = scalar_lea.vmem %s2, %s220
      %p222 = pneg %p101
      %p223 = pneg %p98
      %p224 = pneg %p127
      %p225 = pneg %p124
      %p226 = scmp.lt.s32.totalorder %s20, 0
      %s227 = scalar_select %p226, %s20, 0
      %s228 = smul.addr %s227, 8
      %s229 = scalar_lea.vmem %s3, %s228
      %p230 = pneg %p155
      %p231 = pneg %p152
      %p232 = scmp.lt.s32.totalorder %s21, 3
      %s233 = scalar_select %p232, %s21, 3
      %p234 = scmp.lt.s32.totalorder %s20, 0
      %s235 = scalar_select %p234, %s20, 0
      %s236 = sadd.s32 %s235, %s233
      %s237 = scalar_lea.vmem %s4, %s236
      %p238 = scmp.lt.s32.totalorder %s20, 0
      %s239 = scalar_select %p238, %s20, 0
      %s240 = smul.addr %s239, 8
      %s241 = scalar_lea.vmem %s0, %s240
      %p242 = scmp.lt.s32.totalorder %s21, 3
      %s243 = scalar_select %p242, %s21, 3
      %s244 = smul.addr %s243, 16
      %s245 = smul.addr %s244, 8
      %s246 = scalar_lea.vmem %s1, %s245
      %p247 = scmp.lt.s32.totalorder %s21, 3
      %s248 = scalar_select %p247, %s21, 3
      %s249 = smul.addr %s248, 16
      %s250 = smul.addr %s249, 8
      %s251 = scalar_lea.vmem %s2, %s250
      %p252 = scmp.lt.s32.totalorder %s20, 0
      %s253 = scalar_select %p252, %s20, 0
      %s254 = smul.addr %s253, 8
      %s255 = scalar_lea.vmem %s3, %s254
      %p256 = scmp.lt.s32.totalorder %s21, 3
      %s257 = scalar_select %p256, %s21, 3
      %p258 = scmp.lt.s32.totalorder %s20, 0
      %s259 = scalar_select %p258, %s20, 0
      %s260 = sadd.s32 %s259, %s257
      %s261 = scalar_lea.vmem %s4, %s260
      %p262 = scmp.eq.s32.totalorder %s21, 0
      // Predicated region
      $region33: #{rvq_forward.1} parent=31 // pred_check
        %p263 = pneg %p262
      $region34: #{rvq_forward.1} parent=31 // pred_check_branch
        %265 = sbr.rel (%p263) target = $region36
      $region35: #{rvq_forward.1} parent=31 // pred_region
        %266 = vst [vmem:[%s255] sm:$0xff] 0.0
        %267 = vst [vmem:[%s255 + $0x8] sm:$0xff] 0.0
        %268 = vst [vmem:[%s255 + $0x10] sm:$0xff] 0.0
        %269 = vst [vmem:[%s255 + $0x18] sm:$0xff] 0.0
      $region36: #{rvq_forward.1} parent=31 // pred_fallthru
        _
      %v270 = vld [vmem:[%s241] sm:$0xff]
      %v271 = vld [vmem:[%s241 + $0x8] sm:$0xff]
      %v272 = vld [vmem:[%s241 + $0x10] sm:$0xff]
      %v273 = vld [vmem:[%s241 + $0x18] sm:$0xff]
      %v274 = vld [vmem:[%s255] sm:$0xff]
      %v275 = vld [vmem:[%s255 + $0x8] sm:$0xff]
      %v276 = vld [vmem:[%s255 + $0x10] sm:$0xff]
      %v277 = vld [vmem:[%s255 + $0x18] sm:$0xff]
      %v278 = vsub.f32 %v270, %v274
      %v279 = vsub.f32 %v271, %v275
      %v280 = vsub.f32 %v272, %v276
      %v281 = vsub.f32 %v273, %v277
      %v282 = vld [vmem:[%s246] sm:$0xff]
      %v283 = vld [vmem:[%s246 + $0x8] sm:$0xff]
      %v284 = vld [vmem:[%s246 + $0x10] sm:$0xff]
      %v285 = vld [vmem:[%s246 + $0x18] sm:$0xff]
      %v286 = vld [vmem:[%s246 + $0x20] sm:$0xff]
      %v287 = vld [vmem:[%s246 + $0x28] sm:$0xff]
      %v288 = vld [vmem:[%s246 + $0x30] sm:$0xff]
      %v289 = vld [vmem:[%s246 + $0x38] sm:$0xff]
      %v290 = vld [vmem:[%s246 + $0x40] sm:$0xff]
      %v291 = vld [vmem:[%s246 + $0x48] sm:$0xff]
      %v292 = vld [vmem:[%s246 + $0x50] sm:$0xff]
      %v293 = vld [vmem:[%s246 + $0x58] sm:$0xff]
      %v294 = vld [vmem:[%s246 + $0x60] sm:$0xff]
      %v295 = vld [vmem:[%s246 + $0x68] sm:$0xff]
      %v296 = vld [vmem:[%s246 + $0x70] sm:$0xff]
      %v297 = vld [vmem:[%s246 + $0x78] sm:$0xff]
      %v298 = vld [vmem:[%s251] sm:$0xff]
      %v299 = vld [vmem:[%s251 + $0x8] sm:$0xff]
      %v300 = vld [vmem:[%s251 + $0x10] sm:$0xff]
      %v301 = vld [vmem:[%s251 + $0x18] sm:$0xff]
      %v302 = vld [vmem:[%s251 + $0x20] sm:$0xff]
      %v303 = vld [vmem:[%s251 + $0x28] sm:$0xff]
      %v304 = vld [vmem:[%s251 + $0x30] sm:$0xff]
      %v305 = vld [vmem:[%s251 + $0x38] sm:$0xff]
      %v306 = vld [vmem:[%s251 + $0x40] sm:$0xff]
      %v307 = vld [vmem:[%s251 + $0x48] sm:$0xff]
      %v308 = vld [vmem:[%s251 + $0x50] sm:$0xff]
      %v309 = vld [vmem:[%s251 + $0x58] sm:$0xff]
      %v310 = vld [vmem:[%s251 + $0x60] sm:$0xff]
      %v311 = vld [vmem:[%s251 + $0x68] sm:$0xff]
      %v312 = vld [vmem:[%s251 + $0x70] sm:$0xff]
      %v313 = vld [vmem:[%s251 + $0x78] sm:$0xff]
      %vm314 = vcmask 261120
      %v316 = vsel %vm314, %v282, 0
      %v319 = vsel %vm314, %v283, 0
      %v322 = vsel %vm314, %v284, 0
      %v325 = vsel %vm314, %v285, 0
      %v328 = vsel %vm314, %v286, 0
      %v331 = vsel %vm314, %v287, 0
      %v334 = vsel %vm314, %v288, 0
      %v337 = vsel %vm314, %v289, 0
      %v340 = vsel %vm314, %v290, 0
      %v343 = vsel %vm314, %v291, 0
      %v346 = vsel %vm314, %v292, 0
      %v349 = vsel %vm314, %v293, 0
      %v352 = vsel %vm314, %v294, 0
      %v355 = vsel %vm314, %v295, 0
      %v358 = vsel %vm314, %v296, 0
      %v361 = vsel %vm314, %v297, 0
      %363 = vmatprep.subr.mxu0 0.0
      %364 = vmatpush1.msra.mxu0 %v278
      %365 = vmatprep.subr.mxu0 0.0
      %366 = vmatpush1.msra.mxu0 %v279
      %367 = vmatprep.subr.mxu0 0.0
      %368 = vmatpush1.msra.mxu0 %v280
      %369 = vmatprep.subr.mxu0 0.0
      %370 = vmatpush1.msra.mxu0 %v281
      %371 = vmatprep.subr.mxu0 0.0
      %372 = vmatpush1.msra.mxu0 0.0
      %373 = vmatprep.subr.mxu0 0.0
      %374 = vmatpush1.msra.mxu0 0.0
      %375 = vmatprep.subr.mxu0 0.0
      %376 = vmatpush1.msra.mxu0 0.0
      %377 = vmatprep.subr.mxu0 0.0
      %378 = vmatpush1.msra.mxu0 0.0
      %379 = vmatprep.subr.mxu0 0.0
      %380 = vmatpush1.msra.mxu0 0.0
      %381 = vmatprep.subr.mxu0 0.0
      %382 = vmatpush1.msra.mxu0 0.0
      %383 = vmatprep.subr.mxu0 0.0
      %384 = vmatpush1.msra.mxu0 0.0
      %385 = vmatprep.subr.mxu0 0.0
      %386 = vmatpush1.msra.mxu0 0.0
      %387 = vmatprep.subr.mxu0 0.0
      %388 = vmatpush1.msra.mxu0 0.0
      %389 = vmatprep.subr.mxu0 0.0
      %390 = vmatpush1.msra.mxu0 0.0
      %391 = vmatprep.subr.mxu0 0.0
      %392 = vmatpush1.msra.mxu0 0.0
      %393 = vmatprep.subr.mxu0 0.0
      %394 = vmatpush1.msra.mxu0 0.0
      %395 = vmatprep.subr.mxu0 0.0
      %396 = vmatpush1.msra.mxu0 0.0
      %397 = vmatprep.subr.mxu0 0.0
      %398 = vmatpush1.msra.mxu0 0.0
      %399 = vmatprep.subr.mxu0 0.0
      %400 = vmatpush1.msra.mxu0 0.0
      %401 = vmatprep.subr.mxu0 0.0
      %402 = vmatpush1.msra.mxu0 0.0
      %403 = vmatprep.subr.mxu0 0.0
      %404 = vmatpush1.msra.mxu0 0.0
      %405 = vmatprep.subr.mxu0 0.0
      %406 = vmatpush1.msra.mxu0 0.0
      %407 = vmatprep.subr.mxu0 0.0
      %408 = vmatpush1.msra.mxu0 0.0
      %409 = vmatprep.subr.mxu0 0.0
      %410 = vmatpush1.msra.mxu0 0.0
      %411 = vmatprep.subr.mxu0 0.0
      %412 = vmatpush1.msra.mxu0 0.0
      %413 = vmatprep.subr.mxu0 0.0
      %414 = vmatpush1.msra.mxu0 0.0
      %415 = vmatprep.subr.mxu0 0.0
      %416 = vmatpush1.msra.mxu0 0.0
      %417 = vmatprep.subr.mxu0 0.0
      %418 = vmatpush1.msra.mxu0 0.0
      %419 = vmatprep.subr.mxu0 0.0
      %420 = vmatpush1.msra.mxu0 0.0
      %421 = vmatprep.subr.mxu0 0.0
      %422 = vmatpush1.msra.mxu0 0.0
      %423 = vmatprep.subr.mxu0 0.0
      %424 = vmatpush1.msra.mxu0 0.0
      %425 = vmatprep.subr.mxu0 0.0
      %426 = vmatpush1.msra.mxu0 0.0
      %427 = vmatprep.mubr.f32.mxu0 0.0
      %428 = vmatmul.mubr.f32.gmra.mrb[0].mxu0 %v316
      %v429 = vpop.f32.mrb[0].mxu0
      %v430 = vadd.f32 0.0, %v429
      %v431 = vpop.f32.mrb[0].mxu0
      %432 = vmatprep.mubr.f32.mxu0 0.0
      %433 = vmatmul.mubr.f32.gmra.mrb[0].mxu0 %v319
      %v434 = vpop.f32.mrb[0].mxu0
      %v435 = vadd.f32 0.0, %v434
      %v436 = vpop.f32.mrb[0].mxu0
      %437 = vmatprep.mubr.f32.mxu0 0.0
      %438 = vmatmul.mubr.f32.gmra.mrb[0].mxu0 %v322
      %v439 = vpop.f32.mrb[0].mxu0
      %v440 = vadd.f32 0.0, %v439
      %v441 = vpop.f32.mrb[0].mxu0
      %442 = vmatprep.mubr.f32.mxu0 0.0
      %443 = vmatmul.mubr.f32.gmra.mrb[0].mxu0 %v325
      %v444 = vpop.f32.mrb[0].mxu0
      %v445 = vadd.f32 0.0, %v444
      %v446 = vpop.f32.mrb[0].mxu0
      %447 = vmatprep.mubr.f32.mxu0 0.0
      %448 = vmatmul.mubr.f32.gmra.mrb[0].mxu0 %v328
      %v449 = vpop.f32.mrb[0].mxu0
      %v450 = vadd.f32 0.0, %v449
      %v451 = vpop.f32.mrb[0].mxu0
      %452 = vmatprep.mubr.f32.mxu0 0.0
      %453 = vmatmul.mubr.f32.gmra.mrb[0].mxu0 %v331
      %v454 = vpop.f32.mrb[0].mxu0
      %v455 = vadd.f32 0.0, %v454
      %v456 = vpop.f32.mrb[0].mxu0
      %457 = vmatprep.mubr.f32.mxu0 0.0
      %458 = vmatmul.mubr.f32.gmra.mrb[0].mxu0 %v334
      %v459 = vpop.f32.mrb[0].mxu0
      %v460 = vadd.f32 0.0, %v459
      %v461 = vpop.f32.mrb[0].mxu0
      %462 = vmatprep.mubr.f32.mxu0 0.0
      %463 = vmatmul.mubr.f32.gmra.mrb[0].mxu0 %v337
      %v464 = vpop.f32.mrb[0].mxu0
      %v465 = vadd.f32 0.0, %v464
      %v466 = vpop.f32.mrb[0].mxu0
      %467 = vmatprep.mubr.f32.mxu0 0.0
      %468 = vmatmul.mubr.f32.gmra.mrb[0].mxu0 %v340
      %v469 = vpop.f32.mrb[0].mxu0
      %v470 = vadd.f32 0.0, %v469
      %v471 = vpop.f32.mrb[0].mxu0
      %472 = vmatprep.mubr.f32.mxu0 0.0
      %473 = vmatmul.mubr.f32.gmra.mrb[0].mxu0 %v343
      %v474 = vpop.f32.mrb[0].mxu0
      %v475 = vadd.f32 0.0, %v474
      %v476 = vpop.f32.mrb[0].mxu0
      %477 = vmatprep.mubr.f32.mxu0 0.0
      %478 = vmatmul.mubr.f32.gmra.mrb[0].mxu0 %v346
      %v479 = vpop.f32.mrb[0].mxu0
      %v480 = vadd.f32 0.0, %v479
      %v481 = vpop.f32.mrb[0].mxu0
      %482 = vmatprep.mubr.f32.mxu0 0.0
      %483 = vmatmul.mubr.f32.gmra.mrb[0].mxu0 %v349
      %v484 = vpop.f32.mrb[0].mxu0
      %v485 = vadd.f32 0.0, %v484
      %v486 = vpop.f32.mrb[0].mxu0
      %487 = vmatprep.mubr.f32.mxu0 0.0
      %488 = vmatmul.mubr.f32.gmra.mrb[0].mxu0 %v352
      %v489 = vpop.f32.mrb[0].mxu0
      %v490 = vadd.f32 0.0, %v489
      %v491 = vpop.f32.mrb[0].mxu0
      %492 = vmatprep.mubr.f32.mxu0 0.0
      %493 = vmatmul.mubr.f32.gmra.mrb[0].mxu0 %v355
      %v494 = vpop.f32.mrb[0].mxu0
      %v495 = vadd.f32 0.0, %v494
      %v496 = vpop.f32.mrb[0].mxu0
      %497 = vmatprep.mubr.f32.mxu0 0.0
      %498 = vmatmul.mubr.f32.gmra.mrb[0].mxu0 %v358
      %v499 = vpop.f32.mrb[0].mxu0
      %v500 = vadd.f32 0.0, %v499
      %v501 = vpop.f32.mrb[0].mxu0
      %502 = vmatprep.mubr.f32.mxu0 0.0
      %503 = vmatmul.mubr.f32.gmra.mrb[0].mxu0 %v361
      %v504 = vpop.f32.mrb[0].mxu0
      %v505 = vadd.f32 0.0, %v504
      %v506 = vpop.f32.mrb[0].mxu0
      %507 = vdwg.mxu0
      %v508 = vmul.f32 %v430, 2.0
      %v509 = vmul.f32 %v435, 2.0
      %v510 = vmul.f32 %v440, 2.0
      %v511 = vmul.f32 %v445, 2.0
      %v512 = vmul.f32 %v450, 2.0
      %v513 = vmul.f32 %v455, 2.0
      %v514 = vmul.f32 %v460, 2.0
      %v515 = vmul.f32 %v465, 2.0
      %v516 = vmul.f32 %v470, 2.0
      %v517 = vmul.f32 %v475, 2.0
      %v518 = vmul.f32 %v480, 2.0
      %v519 = vmul.f32 %v485, 2.0
      %v520 = vmul.f32 %v490, 2.0
      %v521 = vmul.f32 %v495, 2.0
      %v522 = vmul.f32 %v500, 2.0
      %v523 = vmul.f32 %v505, 2.0
      %525 = vset.pattern.permute.xlu0 0
      %526 = vperm.xlu0 %525, %v298
      %v527 = vpop.permute.xlu0 %526
      %530 = vset.pattern.permute.xlu0 0
      %531 = vperm.xlu0 %530, %v299
      %v532 = vpop.permute.xlu0 %531
      %535 = vset.pattern.permute.xlu0 0
      %536 = vperm.xlu0 %535, %v300
      %v537 = vpop.permute.xlu0 %536
      %540 = vset.pattern.permute.xlu0 0
      %541 = vperm.xlu0 %540, %v301
      %v542 = vpop.permute.xlu0 %541
      %545 = vset.pattern.permute.xlu0 0
      %546 = vperm.xlu0 %545, %v302
      %v547 = vpop.permute.xlu0 %546
      %550 = vset.pattern.permute.xlu0 0
      %551 = vperm.xlu0 %550, %v303
      %v552 = vpop.permute.xlu0 %551
      %555 = vset.pattern.permute.xlu0 0
      %556 = vperm.xlu0 %555, %v304
      %v557 = vpop.permute.xlu0 %556
      %560 = vset.pattern.permute.xlu0 0
      %561 = vperm.xlu0 %560, %v305
      %v562 = vpop.permute.xlu0 %561
      %565 = vset.pattern.permute.xlu0 0
      %566 = vperm.xlu0 %565, %v306
      %v567 = vpop.permute.xlu0 %566
      %570 = vset.pattern.permute.xlu0 0
      %571 = vperm.xlu0 %570, %v307
      %v572 = vpop.permute.xlu0 %571
      %575 = vset.pattern.permute.xlu0 0
      %576 = vperm.xlu0 %575, %v308
      %v577 = vpop.permute.xlu0 %576
      %580 = vset.pattern.permute.xlu0 0
      %581 = vperm.xlu0 %580, %v309
      %v582 = vpop.permute.xlu0 %581
      %585 = vset.pattern.permute.xlu0 0
      %586 = vperm.xlu0 %585, %v310
      %v587 = vpop.permute.xlu0 %586
      %590 = vset.pattern.permute.xlu0 0
      %591 = vperm.xlu0 %590, %v311
      %v592 = vpop.permute.xlu0 %591
      %595 = vset.pattern.permute.xlu0 0
      %596 = vperm.xlu0 %595, %v312
      %v597 = vpop.permute.xlu0 %596
      %600 = vset.pattern.permute.xlu0 0
      %601 = vperm.xlu0 %600, %v313
      %v602 = vpop.permute.xlu0 %601
      %v604 = vsub.f32 %v508, %v527
      %v605 = vsub.f32 %v509, %v532
      %v606 = vsub.f32 %v510, %v537
      %v607 = vsub.f32 %v511, %v542
      %v608 = vsub.f32 %v512, %v547
      %v609 = vsub.f32 %v513, %v552
      %v610 = vsub.f32 %v514, %v557
      %v611 = vsub.f32 %v515, %v562
      %v612 = vsub.f32 %v516, %v567
      %v613 = vsub.f32 %v517, %v572
      %v614 = vsub.f32 %v518, %v577
      %v615 = vsub.f32 %v519, %v582
      %v616 = vsub.f32 %v520, %v587
      %v617 = vsub.f32 %v521, %v592
      %v618 = vsub.f32 %v522, %v597
      %v619 = vsub.f32 %v523, %v602
      %v620 = vmax.f32 %v604, %v608
      %v621 = vmax.f32 %v605, %v609
      %v622 = vmax.f32 %v606, %v610
      %v623 = vmax.f32 %v607, %v611
      %v624 = vmax.f32 %v620, %v612
      %v625 = vmax.f32 %v621, %v613
      %v626 = vmax.f32 %v622, %v614
      %v627 = vmax.f32 %v623, %v615
      %v628 = vmax.f32 %v624, %v616
      %v629 = vmax.f32 %v625, %v617
      %v630 = vmax.f32 %v626, %v618
      %v631 = vmax.f32 %v627, %v619
      %v632 = vmax.f32 %v628, %v629
      %v633 = vmax.f32 %v630, %v631
      %v634 = vmax.f32 %v632, %v633
      %v635 = vrot.slane %v634, 4
      %v636 = vmax.f32 %v634, %v635
      %v637 = vrot.slane %v636, 2
      %v638 = vmax.f32 %v636, %v637
      %v639 = vrot.slane %v638, 1
      %v640 = vmax.f32 %v638, %v639
      %v641 = vlaneseq
      %v642 = vshrl.u32 %v641, 7
      %v643 = vadd.s32 %v642, 8
      %v644 = vadd.s32 %v642, 16
      %v645 = vadd.s32 %v642, 24
      %v646 = vadd.s32 %v642, 32
      %v647 = vadd.s32 %v642, 40
      %v648 = vadd.s32 %v642, 48
      %v649 = vadd.s32 %v642, 56
      %v650 = vadd.s32 %v642, 64
      %v651 = vadd.s32 %v642, 72
      %v652 = vadd.s32 %v642, 80
      %v653 = vadd.s32 %v642, 88
      %v654 = vadd.s32 %v642, 96
      %v655 = vadd.s32 %v642, 104
      %v656 = vadd.s32 %v642, 112
      %v657 = vadd.s32 %v642, 120
      %vm658 = vcmp.eq.f32.partialorder %v604, %v640
      %vm659 = vcmp.eq.f32.partialorder %v605, %v640
      %vm660 = vcmp.eq.f32.partialorder %v606, %v640
      %vm661 = vcmp.eq.f32.partialorder %v607, %v640
      %vm662 = vcmp.eq.f32.partialorder %v608, %v640
      %vm663 = vcmp.eq.f32.partialorder %v609, %v640
      %vm664 = vcmp.eq.f32.partialorder %v610, %v640
      %vm665 = vcmp.eq.f32.partialorder %v611, %v640
      %vm666 = vcmp.eq.f32.partialorder %v612, %v640
      %vm667 = vcmp.eq.f32.partialorder %v613, %v640
      %vm668 = vcmp.eq.f32.partialorder %v614, %v640
      %vm669 = vcmp.eq.f32.partialorder %v615, %v640
      %vm670 = vcmp.eq.f32.partialorder %v616, %v640
      %vm671 = vcmp.eq.f32.partialorder %v617, %v640
      %vm672 = vcmp.eq.f32.partialorder %v618, %v640
      %vm673 = vcmp.eq.f32.partialorder %v619, %v640
      %v674 = vsel %vm658, %v642, 128
      %v675 = vsel %vm659, %v643, 128
      %v676 = vsel %vm660, %v644, 128
      %v677 = vsel %vm661, %v645, 128
      %v678 = vsel %vm662, %v646, 128
      %v679 = vsel %vm663, %v647, 128
      %v680 = vsel %vm664, %v648, 128
      %v681 = vsel %vm665, %v649, 128
      %v682 = vsel %vm666, %v650, 128
      %v683 = vsel %vm667, %v651, 128
      %v684 = vsel %vm668, %v652, 128
      %v685 = vsel %vm669, %v653, 128
      %v686 = vsel %vm670, %v654, 128
      %v687 = vsel %vm671, %v655, 128
      %v688 = vsel %vm672, %v656, 128
      %v689 = vsel %vm673, %v657, 128
      %vm690 = vcmp.lt.s32.totalorder %v674, %v678
      %v691 = vsel %vm690, %v674, %v678
      %vm692 = vcmp.lt.s32.totalorder %v675, %v679
      %v693 = vsel %vm692, %v675, %v679
      %vm694 = vcmp.lt.s32.totalorder %v676, %v680
      %v695 = vsel %vm694, %v676, %v680
      %vm696 = vcmp.lt.s32.totalorder %v677, %v681
      %v697 = vsel %vm696, %v677, %v681
      %vm698 = vcmp.lt.s32.totalorder %v691, %v682
      %v699 = vsel %vm698, %v691, %v682
      %vm700 = vcmp.lt.s32.totalorder %v693, %v683
      %v701 = vsel %vm700, %v693, %v683
      %vm702 = vcmp.lt.s32.totalorder %v695, %v684
      %v703 = vsel %vm702, %v695, %v684
      %vm704 = vcmp.lt.s32.totalorder %v697, %v685
      %v705 = vsel %vm704, %v697, %v685
      %vm706 = vcmp.lt.s32.totalorder %v699, %v686
      %v707 = vsel %vm706, %v699, %v686
      %vm708 = vcmp.lt.s32.totalorder %v701, %v687
      %v709 = vsel %vm708, %v701, %v687
      %vm710 = vcmp.lt.s32.totalorder %v703, %v688
      %v711 = vsel %vm710, %v703, %v688
      %vm712 = vcmp.lt.s32.totalorder %v705, %v689
      %v713 = vsel %vm712, %v705, %v689
      %vm714 = vcmp.lt.s32.totalorder %v707, %v709
      %v715 = vsel %vm714, %v707, %v709
      %vm716 = vcmp.lt.s32.totalorder %v711, %v713
      %v717 = vsel %vm716, %v711, %v713
      %vm718 = vcmp.lt.s32.totalorder %v715, %v717
      %v719 = vsel %vm718, %v715, %v717
      %v720 = vrot.slane %v719, 4
      %vm721 = vcmp.lt.s32.totalorder %v719, %v720
      %v722 = vsel %vm721, %v719, %v720
      %v723 = vrot.slane %v722, 2
      %vm724 = vcmp.lt.s32.totalorder %v722, %v723
      %v725 = vsel %vm724, %v722, %v723
      %v726 = vrot.slane %v725, 1
      %vm727 = vcmp.lt.s32.totalorder %v725, %v726
      %v728 = vsel %vm727, %v725, %v726
      %vm729 = vcmp.eq.s32.totalorder %v642, %v728
      %vm730 = vcmp.eq.s32.totalorder %v643, %v728
      %vm731 = vcmp.eq.s32.totalorder %v644, %v728
      %vm732 = vcmp.eq.s32.totalorder %v645, %v728
      %vm733 = vcmp.eq.s32.totalorder %v646, %v728
      %vm734 = vcmp.eq.s32.totalorder %v647, %v728
      %vm735 = vcmp.eq.s32.totalorder %v648, %v728
      %vm736 = vcmp.eq.s32.totalorder %v649, %v728
      %vm737 = vcmp.eq.s32.totalorder %v650, %v728
      %vm738 = vcmp.eq.s32.totalorder %v651, %v728
      %vm739 = vcmp.eq.s32.totalorder %v652, %v728
      %vm740 = vcmp.eq.s32.totalorder %v653, %v728
      %vm741 = vcmp.eq.s32.totalorder %v654, %v728
      %vm742 = vcmp.eq.s32.totalorder %v655, %v728
      %vm743 = vcmp.eq.s32.totalorder %v656, %v728
      %vm744 = vcmp.eq.s32.totalorder %v657, %v728
      %v745 = vsel %vm729, 1, 0
      %v746 = vsel %vm730, 1, 0
      %v747 = vsel %vm731, 1, 0
      %v748 = vsel %vm732, 1, 0
      %v749 = vsel %vm733, 1, 0
      %v750 = vsel %vm734, 1, 0
      %v751 = vsel %vm735, 1, 0
      %v752 = vsel %vm736, 1, 0
      %v753 = vsel %vm737, 1, 0
      %v754 = vsel %vm738, 1, 0
      %v755 = vsel %vm739, 1, 0
      %v756 = vsel %vm740, 1, 0
      %v757 = vsel %vm741, 1, 0
      %v758 = vsel %vm742, 1, 0
      %v759 = vsel %vm743, 1, 0
      %v760 = vsel %vm744, 1, 0
      %v761 = vcvt.s32.f32 %v745
      %v762 = vcvt.s32.f32 %v746
      %v763 = vcvt.s32.f32 %v747
      %v764 = vcvt.s32.f32 %v748
      %v765 = vcvt.s32.f32 %v749
      %v766 = vcvt.s32.f32 %v750
      %v767 = vcvt.s32.f32 %v751
      %v768 = vcvt.s32.f32 %v752
      %v769 = vcvt.s32.f32 %v753
      %v770 = vcvt.s32.f32 %v754
      %v771 = vcvt.s32.f32 %v755
      %v772 = vcvt.s32.f32 %v756
      %v773 = vcvt.s32.f32 %v757
      %v774 = vcvt.s32.f32 %v758
      %v775 = vcvt.s32.f32 %v759
      %v776 = vcvt.s32.f32 %v760
      %777 = vxpose.xlu0.b32.start [1/16] %v282, 128
      %778 = vxpose.xlu0.b32.cont [2/16] %v283, 128
      %779 = vxpose.xlu0.b32.cont [3/16] %v284, 128
      %780 = vxpose.xlu0.b32.cont [4/16] %v285, 128
      %781 = vxpose.xlu0.b32.cont [5/16] %v286, 128
      %782 = vxpose.xlu0.b32.cont [6/16] %v287, 128
      %783 = vxpose.xlu0.b32.cont [7/16] %v288, 128
      %784 = vxpose.xlu0.b32.cont [8/16] %v289, 128
      %785 = vxpose.xlu0.b32.cont [9/16] %v290, 128
      %786 = vxpose.xlu0.b32.cont [10/16] %v291, 128
      %787 = vxpose.xlu0.b32.cont [11/16] %v292, 128
      %788 = vxpose.xlu0.b32.cont [12/16] %v293, 128
      %789 = vxpose.xlu0.b32.cont [13/16] %v294, 128
      %790 = vxpose.xlu0.b32.cont [14/16] %v295, 128
      %791 = vxpose.xlu0.b32.cont [15/16] %v296, 128
      %792 = vxpose.xlu0.b32.end [16/16] %v297, 128
      %v793 = vpop.trf.xlu0
      %v794 = vpop.trf.xlu0
      %v795 = vpop.trf.xlu0
      %v796 = vpop.trf.xlu0
      %v797 = vpop.trf.xlu0
      %v798 = vpop.trf.xlu0
      %v799 = vpop.trf.xlu0
      %v800 = vpop.trf.xlu0
      %v801 = vpop.trf.xlu0
      %v802 = vpop.trf.xlu0
      %v803 = vpop.trf.xlu0
      %v804 = vpop.trf.xlu0
      %v805 = vpop.trf.xlu0
      %v806 = vpop.trf.xlu0
      %v807 = vpop.trf.xlu0
      %v808 = vpop.trf.xlu0
      %809 = vmatprep.subr.mxu0 0.0
      %810 = vmatpush1.msra.mxu0 %v761
      %811 = vmatprep.subr.mxu0 0.0
      %812 = vmatpush1.msra.mxu0 %v762
      %813 = vmatprep.subr.mxu0 0.0
      %814 = vmatpush1.msra.mxu0 %v763
      %815 = vmatprep.subr.mxu0 0.0
      %816 = vmatpush1.msra.mxu0 %v764
      %817 = vmatprep.subr.mxu0 0.0
      %818 = vmatpush1.msra.mxu0 %v765
      %819 = vmatprep.subr.mxu0 0.0
      %820 = vmatpush1.msra.mxu0 %v766
      %821 = vmatprep.subr.mxu0 0.0
      %822 = vmatpush1.msra.mxu0 %v767
      %823 = vmatprep.subr.mxu0 0.0
      %824 = vmatpush1.msra.mxu0 %v768
      %825 = vmatprep.subr.mxu0 0.0
      %826 = vmatpush1.msra.mxu0 %v769
      %827 = vmatprep.subr.mxu0 0.0
      %828 = vmatpush1.msra.mxu0 %v770
      %829 = vmatprep.subr.mxu0 0.0
      %830 = vmatpush1.msra.mxu0 %v771
      %831 = vmatprep.subr.mxu0 0.0
      %832 = vmatpush1.msra.mxu0 %v772
      %833 = vmatprep.subr.mxu0 0.0
      %834 = vmatpush1.msra.mxu0 %v773
      %835 = vmatprep.subr.mxu0 0.0
      %836 = vmatpush1.msra.mxu0 %v774
      %837 = vmatprep.subr.mxu0 0.0
      %838 = vmatpush1.msra.mxu0 %v775
      %839 = vmatprep.subr.mxu0 0.0
      %840 = vmatpush1.msra.mxu0 %v776
      %841 = vmatprep.subr.mxu0 0.0
      %842 = vmatpush1.msra.mxu0 0.0
      %843 = vmatprep.subr.mxu0 0.0
      %844 = vmatpush1.msra.mxu0 0.0
      %845 = vmatprep.subr.mxu0 0.0
      %846 = vmatpush1.msra.mxu0 0.0
      %847 = vmatprep.subr.mxu0 0.0
      %848 = vmatpush1.msra.mxu0 0.0
      %849 = vmatprep.subr.mxu0 0.0
      %850 = vmatpush1.msra.mxu0 0.0
      %851 = vmatprep.subr.mxu0 0.0
      %852 = vmatpush1.msra.mxu0 0.0
      %853 = vmatprep.subr.mxu0 0.0
      %854 = vmatpush1.msra.mxu0 0.0
      %855 = vmatprep.subr.mxu0 0.0
      %856 = vmatpush1.msra.mxu0 0.0
      %857 = vmatprep.subr.mxu0 0.0
      %858 = vmatpush1.msra.mxu0 0.0
      %859 = vmatprep.subr.mxu0 0.0
      %860 = vmatpush1.msra.mxu0 0.0
      %861 = vmatprep.subr.mxu0 0.0
      %862 = vmatpush1.msra.mxu0 0.0
      %863 = vmatprep.subr.mxu0 0.0
      %864 = vmatpush1.msra.mxu0 0.0
      %865 = vmatprep.subr.mxu0 0.0
      %866 = vmatpush1.msra.mxu0 0.0
      %867 = vmatprep.subr.mxu0 0.0
      %868 = vmatpush1.msra.mxu0 0.0
      %869 = vmatprep.subr.mxu0 0.0
      %870 = vmatpush1.msra.mxu0 0.0
      %871 = vmatprep.subr.mxu0 0.0
      %872 = vmatpush1.msra.mxu0 0.0
      %873 = vmatprep.mubr.f32.mxu0 0.0
      %874 = vmatmul.mubr.f32.gmra.mrb[0].mxu0 %v793
      %v875 = vpop.f32.mrb[0].mxu0
      %v876 = vadd.f32 0.0, %v875
      %v877 = vpop.f32.mrb[0].mxu0
      %878 = vmatprep.mubr.f32.mxu0 0.0
      %879 = vmatmul.mubr.f32.gmra.mrb[0].mxu0 %v794
      %v880 = vpop.f32.mrb[0].mxu0
      %v881 = vadd.f32 0.0, %v880
      %v882 = vpop.f32.mrb[0].mxu0
      %883 = vmatprep.mubr.f32.mxu0 0.0
      %884 = vmatmul.mubr.f32.gmra.mrb[0].mxu0 %v795
      %v885 = vpop.f32.mrb[0].mxu0
      %v886 = vadd.f32 0.0, %v885
      %v887 = vpop.f32.mrb[0].mxu0
      %888 = vmatprep.mubr.f32.mxu0 0.0
      %889 = vmatmul.mubr.f32.gmra.mrb[0].mxu0 %v796
      %v890 = vpop.f32.mrb[0].mxu0
      %v891 = vadd.f32 0.0, %v890
      %v892 = vpop.f32.mrb[0].mxu0
      %893 = vdwg.mxu0
      %v894 = vadd.f32 %v274, %v876
      %v895 = vadd.f32 %v275, %v881
      %v896 = vadd.f32 %v276, %v886
      %v897 = vadd.f32 %v277, %v891
      %898 = vst [vmem:[%s255] sm:$0xff] %v894
      %899 = vst [vmem:[%s255 + $0x8] sm:$0xff] %v895
      %900 = vst [vmem:[%s255 + $0x10] sm:$0xff] %v896
      %901 = vst [vmem:[%s255 + $0x18] sm:$0xff] %v897
      %902 = vst [vmem:[%s261] sm:$0x1] %v728
      %p903 = scmp.lt.s32.totalorder %s20, 0
      %s904 = scalar_select %p903, %s20, 0
      %s905 = smul.addr %s904, 8
      %s906 = scalar_lea.vmem %s3, %s905
      %p907 = scmp.lt.s32.totalorder %s21, 3
      %s908 = scalar_select %p907, %s21, 3
      %p909 = scmp.lt.s32.totalorder %s20, 0
      %s910 = scalar_select %p909, %s20, 0
      %s911 = sadd.s32 %s910, %s908
      %s912 = scalar_lea.vmem %s4, %s911
      // Predicated region
      $region37: #{rvq_forward.1} parent=31 // pred_check
        %p913 = pneg %p124
      $region38: #{rvq_forward.1} parent=31 // pred_check_branch
        %915 = sbr.rel (%p913) target = $region40
      $region39: #{rvq_forward.1} parent=31 // pred_region
        _
      $region40: #{rvq_forward.1} parent=31 // pred_fallthru
        _
      // Predicated region
      $region41: #{rvq_forward.1} parent=31 // pred_check
        %p916 = pneg %p152
      $region42: #{rvq_forward.1} parent=31 // pred_check_branch
        %918 = sbr.rel (%p916) target = $region44
      $region43: #{rvq_forward.1} parent=31 // pred_region
        _
      $region44: #{rvq_forward.1} parent=31 // pred_fallthru
        _
      // Predicated region
      $region45: #{rvq_forward.1} parent=31 // pred_check
        %p919 = pneg %p124
      $region46: #{rvq_forward.1} parent=31 // pred_check_branch
        %921 = sbr.rel (%p919) target = $region48
      $region47: #{rvq_forward.1} parent=31 // pred_region
        %p922 = scmp.lt.s32.totalorder %s20, 0
        %s923 = scalar_select %p922, %s20, 0
        %s924 = smul.addr %s923, 8
        %s925 = scalar_lea.vmem %s3, %s924
      $region48: #{rvq_forward.1} parent=31 // pred_fallthru
        _
    $region32: #{rvq_forward.1} parent=5 // pred_fallthru
      _
    %p926 = scmp.le.s32.totalorder 2, %s11
    // Predicated region
    $region49: #{rvq_forward.1} parent=5 // pred_check
      %p927 = pneg %p926
    $region50: #{rvq_forward.1} parent=5 // pred_check_branch
      %929 = sbr.rel (%p927) target = $region52
    $region51: #{rvq_forward.1} parent=5 // pred_region
      %s930 = ssub.s32 %s11, 2
      // Predicated region
      $region53: #{rvq_forward.1} parent=51 // pred_check
        %p931 = pneg %p158
      $region54: #{rvq_forward.1} parent=51 // pred_check_branch
        %933 = sbr.rel (%p931) target = $region56
      $region55: #{rvq_forward.1} parent=51 // pred_region
        %p934 = scmp.lt.s32.totalorder %s23, 3
        %s935 = scalar_select %p934, %s23, 3
        %p936 = scmp.lt.s32.totalorder %s22, 0
        %s937 = scalar_select %p936, %s22, 0
        %s938 = sadd.s32 %s937, %s935
        %s939 = scalar_lea.vmem %s4, %s938
      $region56: #{rvq_forward.1} parent=51 // pred_fallthru
        _
    $region52: #{rvq_forward.1} parent=5 // pred_fallthru
      _
  $region6: #{rvq_forward.1} parent=0 // loop_footer
    %s15 = sadd.s32 1, %s11
  $region7: #{rvq_forward.1} parent=0 // loop_footer_branch
    %10 = sbr.rel target = $region3
  $region8: #{rvq_forward.1} parent=0 // loop_exit
    _

</llo_original>
